<compile_context>
chip_gen: v7x
topology: tpu7x:2x2x1
jax: 0.10.0
libtpu: 0.0.40
codegen_flags: <defaults>
</compile_context>

<pallas_src>
import functools

import jax
import jax.numpy as jnp
from jax.experimental import pallas as pl
from jax.experimental.pallas import tpu as pltpu


def _round_up(n, m):
    return ((n + m - 1) // m) * m


def _head_kernel(x_ref, w1_ref, b1_ref, w2_ref, b2_ref, o_ref):
    # x_ref:  [TB, Hp] f32   (batch tile; cast to bf16 in-kernel so the wrapper never
    #                         does a standalone f32->bf16 HBM pass)
    # w1_ref: [Hp, Hp] bf16  (resident across the batch grid: constant index_map)
    # b1_ref: [1,  Hp] f32
    # w2_ref: [Hp, Cp] bf16  (resident)
    # b2_ref: [1,  Cp] f32
    # o_ref:  [TB, Cp] f32   (lane-dense padded output -> unmasked vst)
    x = x_ref[...].astype(jnp.bfloat16)                       # VPU cast, overlaps MXU
    h = jnp.dot(x, w1_ref[...],
                preferred_element_type=jnp.float32)           # MXU, f32 acc
    h = jnp.tanh(h + b1_ref[...])                             # f32 VPU add + EUP tanh
    # Dropout: identity in eval mode.
    # TODO(synk): training-mode dropout would need pltpu.prng_seed/prng_random_bits.
    y = jnp.dot(h.astype(jnp.bfloat16), w2_ref[...],
                preferred_element_type=jnp.float32)           # MXU, f32 acc
    o_ref[...] = y + b2_ref[...]                              # bias into output tile


def prepare_hubert_head_params(w1, b1, w2, b2):
    """One-time parameter prep (call once at model-load time, reuse per call).

    Casts the two Linear weights to bf16 and zero-pads hidden/class dims up to
    multiples of 128.  For real Hubert (H=768/1024, already 128-aligned) the
    hidden-dim pad is skipped entirely; only the one-time bf16 cast and the
    tiny class-dim pad remain.  Returns (w1p, b1p, w2p, b2p, num_class).
    """
    H = w1.shape[0]
    C = w2.shape[1]
    Hp = _round_up(H, 128)
    Cp = _round_up(C, 128)
    bf16, f32 = jnp.bfloat16, jnp.float32

    if Hp == H:
        w1p = w1.astype(bf16)
        b1p = b1.reshape(1, H).astype(f32)
    else:
        w1p = jnp.zeros((Hp, Hp), bf16).at[:H, :H].set(w1.astype(bf16))
        b1p = jnp.zeros((1, Hp), f32).at[:, :H].set(b1.reshape(1, H).astype(f32))

    if Hp == H and Cp == C:
        w2p = w2.astype(bf16)
        b2p = b2.reshape(1, C).astype(f32)
    else:
        w2p = jnp.zeros((Hp, Cp), bf16).at[:H, :C].set(w2.astype(bf16))
        b2p = jnp.zeros((1, Cp), f32).at[:, :C].set(b2.reshape(1, C).astype(f32))

    return w1p, b1p, w2p, b2p, C


def _choose_tb(batch):
    """Batch tile size: multiple of 16 rows, <=512 rows, and an (even) tile count
    >= 2 whenever batch > 16 so both v7x TensorCores get work while v6e amortizes
    per-step overhead with large tiles."""
    if batch <= 16:
        return _round_up(batch, 8)          # single tiny tile; nothing to shard
    n_tiles = 2 * pl.cdiv(batch, 1024)      # even tile count, tiles capped near 512 rows
    return max(16, _round_up(pl.cdiv(batch, n_tiles), 16))


@functools.partial(jax.jit, static_argnames=("num_class",))
def hubert_classification_head(x, w1p, b1p, w2p, b2p, *, num_class):
    """x:[B,H] f32 -> [B,num_class] f32.

    Computes y = tanh(x @ w1 + b1) @ w2 + b2 (nn.Linear weights pre-transposed,
    dropout = identity / eval mode).  w1p/b1p/w2p/b2p come from
    prepare_hubert_head_params (pre-padded, pre-cast, done once).
    """
    B, H = x.shape
    Hp = w1p.shape[0]
    Cp = w2p.shape[1]

    # Only unaligned (toy) shapes need a pad copy of x; real Hubert (H=768/1024,
    # B a multiple of 8) passes x straight through with zero extra HBM traffic.
    Bp = _round_up(B, 8)
    if (Bp, Hp) != (B, H):
        x = jnp.zeros((Bp, Hp), x.dtype).at[:B, :H].set(x)

    TB = _choose_tb(Bp)
    grid = pl.cdiv(Bp, TB)  # ragged last batch tile handled by Pallas: OOB input rows
    #                         only produce OOB output rows, which are dropped on store;
    #                         the contraction dim Hp is aligned / zero-padded.

    cost = pl.CostEstimate(
        flops=2 * Bp * Hp * Hp + 2 * Bp * Hp * Cp,
        transcendentals=Bp * Hp,
        bytes_accessed=(x.size * x.dtype.itemsize
                        + w1p.size * 2 + w2p.size * 2
                        + b1p.size * 4 + b2p.size * 4
                        + Bp * Cp * 4),
    )

    out = pl.pallas_call(
        _head_kernel,
        out_shape=jax.ShapeDtypeStruct((Bp, Cp), jnp.float32),
        grid=(grid,),
        in_specs=[
            pl.BlockSpec((TB, Hp), lambda i: (i, 0)),   # x: pipelined over batch tiles
            pl.BlockSpec((Hp, Hp), lambda i: (0, 0)),   # w1: resident in VMEM
            pl.BlockSpec((1, Hp), lambda i: (0, 0)),    # b1: resident
            pl.BlockSpec((Hp, Cp), lambda i: (0, 0)),   # w2: resident
            pl.BlockSpec((1, Cp), lambda i: (0, 0)),    # b2: resident
        ],
        out_specs=pl.BlockSpec((TB, Cp), lambda i: (i, 0)),
        compiler_params=pltpu.CompilerParams(
            dimension_semantics=("parallel",),           # megacore / 2-TC batch sharding
        ),
        cost_estimate=cost,
    )(x, w1p, b1p, w2p, b2p)

    return out[:B, :num_class]


if __name__ == "__main__":
    # Small, self-consistent shapes: batch=8, hidden=32, num_class=6.
    B, H, C = 8, 32, 6
    key = jax.random.PRNGKey(0)
    kx, k1, k2, k3, k4 = jax.random.split(key, 5)

    x = jax.random.normal(kx, (B, H), dtype=jnp.float32)
    # Deterministic synthetic parameters (nn.Linear shapes, pre-transposed).
    w1 = jax.random.normal(k1, (H, H), dtype=jnp.float32) * 0.05
    b1 = jax.random.normal(k2, (1, H), dtype=jnp.float32) * 0.01
    w2 = jax.random.normal(k3, (H, C), dtype=jnp.float32) * 0.05
    b2 = jax.random.normal(k4, (1, C), dtype=jnp.float32) * 0.01

    # One-time parameter prep (pad/cast); the per-call path touches only x.
    w1p, b1p, w2p, b2p, num_class = prepare_hubert_head_params(w1, b1, w2, b2)

    out = hubert_classification_head(x, w1p, b1p, w2p, b2p, num_class=num_class)
    out = jax.block_until_ready(out)

    # Pure-JAX f32 reference of the same forward pass (tolerance accounts for the
    # bf16 matmul operands; accumulation in the kernel is f32).
    ref = jnp.tanh(x @ w1 + b1) @ w2 + b2
    assert out.shape == (B, C)
    assert jnp.allclose(out, ref, atol=1e-2, rtol=1e-2), (
        f"max abs err {jnp.max(jnp.abs(out - ref))}")

    print("KERNEL_OK")
</pallas_src>

<mosaic_0001>
module attributes {stable_mosaic.version = 11 : i64} {
  func.func @_head_kernel(%arg0: i32, %arg1: memref<8x128xf32, #tpu.memory_space<vmem>>, %arg2: memref<128x128xbf16, #tpu.memory_space<vmem>>, %arg3: memref<1x128xf32, #tpu.memory_space<vmem>>, %arg4: memref<128x128xbf16, #tpu.memory_space<vmem>>, %arg5: memref<1x128xf32, #tpu.memory_space<vmem>>, %arg6: memref<8x128xf32, #tpu.memory_space<vmem>>) attributes {dimension_semantics = [#tpu.dimension_semantics<parallel>], iteration_bounds = array<i64: 1>, scalar_prefetch = 0 : i64, scratch_operands = 0 : i64, tpu.core_type = #tpu.core_type<tc>, window_params = [{transform_indices = @transform_0, window_bounds = array<i64: 8, 128>}, {pipeline_mode = #tpu.pipeline_mode<synchronous>, transform_indices = @transform_1, window_bounds = array<i64: 128, 128>}, {pipeline_mode = #tpu.pipeline_mode<synchronous>, transform_indices = @transform_2, window_bounds = array<i64: 1, 128>}, {pipeline_mode = #tpu.pipeline_mode<synchronous>, transform_indices = @transform_3, window_bounds = array<i64: 128, 128>}, {pipeline_mode = #tpu.pipeline_mode<synchronous>, transform_indices = @transform_4, window_bounds = array<i64: 1, 128>}, {transform_indices = @transform_5, window_bounds = array<i64: 8, 128>}]} {
    %c0 = arith.constant 0 : index
    %c0_0 = arith.constant 0 : index
    %0 = vector.load %arg1[%c0, %c0_0] : memref<8x128xf32, #tpu.memory_space<vmem>>, vector<8x128xf32>
    %1 = arith.truncf %0 : vector<8x128xf32> to vector<8x128xbf16>
    %c0_1 = arith.constant 0 : index
    %c0_2 = arith.constant 0 : index
    %2 = vector.load %arg2[%c0_1, %c0_2] : memref<128x128xbf16, #tpu.memory_space<vmem>>, vector<128x128xbf16>
    %cst = arith.constant dense<0.000000e+00> : vector<8x128xf32>
    %3 = tpu.matmul %1, %2, %cst {dimension_numbers = #tpu.dot_dimension_numbers<[1], [0], [0], [1], [0, 0, 1, 1], [], []>} : vector<8x128xbf16>, vector<128x128xbf16>, vector<8x128xf32> -> vector<8x128xf32>
    %c0_3 = arith.constant 0 : index
    %c0_4 = arith.constant 0 : index
    %4 = vector.load %arg3[%c0_3, %c0_4] : memref<1x128xf32, #tpu.memory_space<vmem>>, vector<1x128xf32>
    %5 = vector.broadcast %4 : vector<1x128xf32> to vector<8x128xf32>
    %6 = arith.addf %3, %5 : vector<8x128xf32>
    %7 = math.tanh %6 : vector<8x128xf32>
    %8 = arith.truncf %7 : vector<8x128xf32> to vector<8x128xbf16>
    %c0_5 = arith.constant 0 : index
    %c0_6 = arith.constant 0 : index
    %9 = vector.load %arg4[%c0_5, %c0_6] : memref<128x128xbf16, #tpu.memory_space<vmem>>, vector<128x128xbf16>
    %cst_7 = arith.constant dense<0.000000e+00> : vector<8x128xf32>
    %10 = tpu.matmul %8, %9, %cst_7 {dimension_numbers = #tpu.dot_dimension_numbers<[1], [0], [0], [1], [0, 0, 1, 1], [], []>} : vector<8x128xbf16>, vector<128x128xbf16>, vector<8x128xf32> -> vector<8x128xf32>
    %c0_8 = arith.constant 0 : index
    %c0_9 = arith.constant 0 : index
    %11 = vector.load %arg5[%c0_8, %c0_9] : memref<1x128xf32, #tpu.memory_space<vmem>>, vector<1x128xf32>
    %12 = vector.broadcast %11 : vector<1x128xf32> to vector<8x128xf32>
    %13 = arith.addf %10, %12 : vector<8x128xf32>
    %c0_10 = arith.constant 0 : index
    %c0_11 = arith.constant 0 : index
    %14 = vector.load %arg6[%c0_10, %c0_11] : memref<8x128xf32, #tpu.memory_space<vmem>>, vector<8x128xf32>
    tpu.vector_store %arg6[%c0_10, %c0_11], %13 {strides = array<i32>} : memref<8x128xf32, #tpu.memory_space<vmem>>, vector<8x128xf32>,
    return
  }
  func.func @transform_0(%arg0: i32) -> (i32, i32) {
    %c0_i32 = arith.constant 0 : i32
    %c0_i32_0 = arith.constant 0 : i32
    return %arg0, %c0_i32 : i32, i32
  }
  func.func @transform_1(%arg0: i32) -> (i32, i32) {
    %c0_i32 = arith.constant 0 : i32
    %c0_i32_0 = arith.constant 0 : i32
    %c0_i32_1 = arith.constant 0 : i32
    return %c0_i32, %c0_i32_0 : i32, i32
  }
  func.func @transform_2(%arg0: i32) -> (i32, i32) {
    %c0_i32 = arith.constant 0 : i32
    %c0_i32_0 = arith.constant 0 : i32
    %c0_i32_1 = arith.constant 0 : i32
    return %c0_i32, %c0_i32_0 : i32, i32
  }
  func.func @transform_3(%arg0: i32) -> (i32, i32) {
    %c0_i32 = arith.constant 0 : i32
    %c0_i32_0 = arith.constant 0 : i32
    %c0_i32_1 = arith.constant 0 : i32
    return %c0_i32, %c0_i32_0 : i32, i32
  }
  func.func @transform_4(%arg0: i32) -> (i32, i32) {
    %c0_i32 = arith.constant 0 : i32
    %c0_i32_0 = arith.constant 0 : i32
    %c0_i32_1 = arith.constant 0 : i32
    return %c0_i32, %c0_i32_0 : i32, i32
  }
  func.func @transform_5(%arg0: i32) -> (i32, i32) {
    %c0_i32 = arith.constant 0 : i32
    %c0_i32_0 = arith.constant 0 : i32
    return %arg0, %c0_i32 : i32, i32
  }
}

</mosaic_0001>

<llo_original>
// kernel: hubert_classification_head.1
$region0: #{hubert_classification_head.1}
  #allocation0 [shape = 'u32[]', space=smem, size = 0x4, offset = 0x4, fixed_abs, tag = 'smem constant byte address 0x4 - core index']
  #allocation1 [shape = 'u32[144,128]{1,0:T(1,128)}', space=vmem, size = 0x12000, scoped, tag = 'internal scratch']
  %s0 = inlined_call_operand.vmem [shape: f32[8,128], index: 0, kind: input, shape index: {}]
  %s1 = inlined_call_operand.hbm [shape: bf16[128,128], index: 1, kind: input, shape index: {}]
  %s2 = inlined_call_operand.vmem [shape: f32[1,128], index: 2, kind: input, shape index: {}]
  %s3 = inlined_call_operand.hbm [shape: bf16[128,128], index: 3, kind: input, shape index: {}]
  %s4 = inlined_call_operand.vmem [shape: f32[1,128], index: 4, kind: input, shape index: {}]
  %s5 = inlined_call_operand.hbm [shape: f32[8,128], index: 5, kind: output, shape index: {}]
  %s6 = sld [smem:[#allocation0]]
  $region38: #{hubert_classification_head.1} parent=0
    _
  %s8 = ssub.s32 1, %s6
  %s9 = scalar_select 0, %s8, %s6
  $region1: #{hubert_classification_head.1} parent=0
    #allocation2 [shape = 'u8[32768]{0}', space=vmem, size = 0x8000, scoped, tag = 'input window, operand 1, single buffered']
    #allocation3 [shape = 's32[1]{0}', space=sflag, size = 0x4, scoped, tag = 'scoped memory for hubert_classification_head.1']
    #allocation4 [shape = 's32[1]{0}', space=sflag, size = 0x4, scoped, tag = 'scoped memory for hubert_classification_head.1']
    #allocation5 [shape = 'u8[32768]{0}', space=vmem, size = 0x8000, scoped, tag = 'input window, operand 3, single buffered']
    #allocation6 [shape = 's32[1]{0}', space=sflag, size = 0x4, scoped, tag = 'scoped memory for hubert_classification_head.1']
    #allocation7 [shape = 'u8[4096]{0}', space=vmem, size = 0x1000, scoped, tag = 'output window, operand 0, single buffered']
    %10 = vsyncpa [#allocation3], 0
    %11 = vsyncpa [#allocation6], 0
    %12 = vsyncpa [#allocation4], 0
    // Predicated region
    $region2: #{hubert_classification_head.1} parent=1 // pred_check
      _
    $region3: #{hubert_classification_head.1} parent=1 // pred_check_branch
      %14 = sbr.rel (0) target = $region5
    $region4: #{hubert_classification_head.1} parent=1 // pred_region
      _
    $region5: #{hubert_classification_head.1} parent=1 // pred_fallthru
      _
    // Predicated region
    $region6: #{hubert_classification_head.1} parent=1 // pred_check
      _
    $region7: #{hubert_classification_head.1} parent=1 // pred_check_branch
      %16 = sbr.rel (0) target = $region9
    $region8: #{hubert_classification_head.1} parent=1 // pred_region
      %s18 = ssub.s32 1024, 1024
      %19 = vsyncadd [#allocation3], %s18
      %s20 = sshll.u32 [#allocation2], 4
      %s21 = int_to_ptr.vmem [resolvable:$true] %s20
      %26 = dma.hbm_to_vmem [thread:$0]  %s1, 1024, %s21, [#allocation3], 64, 64, 4
    $region9: #{hubert_classification_head.1} parent=1 // pred_fallthru
      _
    // Predicated region
    $region10: #{hubert_classification_head.1} parent=1 // pred_check
      _
    $region11: #{hubert_classification_head.1} parent=1 // pred_check_branch
      %28 = sbr.rel (0) target = $region13
    $region12: #{hubert_classification_head.1} parent=1 // pred_region
      _
    $region13: #{hubert_classification_head.1} parent=1 // pred_fallthru
      _
    // Predicated region
    $region14: #{hubert_classification_head.1} parent=1 // pred_check
      _
    $region15: #{hubert_classification_head.1} parent=1 // pred_check_branch
      %30 = sbr.rel (0) target = $region17
    $region16: #{hubert_classification_head.1} parent=1 // pred_region
      %s32 = ssub.s32 1024, 1024
      %33 = vsyncadd [#allocation6], %s32
      %s34 = sshll.u32 [#allocation5], 4
      %s35 = int_to_ptr.vmem [resolvable:$true] %s34
      %40 = dma.hbm_to_vmem [thread:$0]  %s3, 1024, %s35, [#allocation6], 64, 64, 4
    $region17: #{hubert_classification_head.1} parent=1 // pred_fallthru
      _
    // Predicated region
    $region18: #{hubert_classification_head.1} parent=1 // pred_check
      _
    $region19: #{hubert_classification_head.1} parent=1 // pred_check_branch
      %42 = sbr.rel (0) target = $region21
    $region20: #{hubert_classification_head.1} parent=1 // pred_region
      _
    $region21: #{hubert_classification_head.1} parent=1 // pred_fallthru
      _
    // Predicated region
    $region22: #{hubert_classification_head.1} parent=1 // pred_check
      _
    $region23: #{hubert_classification_head.1} parent=1 // pred_check_branch
      %44 = sbr.rel (0) target = $region25
    $region24: #{hubert_classification_head.1} parent=1 // pred_region
      %45 = dma.done [#allocation3], 1024
    $region25: #{hubert_classification_head.1} parent=1 // pred_fallthru
      _
    // Predicated region
    $region26: #{hubert_classification_head.1} parent=1 // pred_check
      _
    $region27: #{hubert_classification_head.1} parent=1 // pred_check_branch
      %47 = sbr.rel (0) target = $region29
    $region28: #{hubert_classification_head.1} parent=1 // pred_region
      %48 = dma.done [#allocation6], 1024
    $region29: #{hubert_classification_head.1} parent=1 // pred_fallthru
      _
    %v50 = vld [vmem:[%s0] sm:$0xff]
    %v51 = vpack.c.bf16 %v50, %v50
    %v52 = vld [vmem:[#allocation2] sm:$0xf]
    %v53 = vld [vmem:[#allocation2 + $0x4] sm:$0xf]
    %v54 = vld [vmem:[#allocation2 + $0x8] sm:$0xf]
    %v55 = vld [vmem:[#allocation2 + $0xc] sm:$0xf]
    %v56 = vld [vmem:[#allocation2 + $0x10] sm:$0xf]
    %v57 = vld [vmem:[#allocation2 + $0x14] sm:$0xf]
    %v58 = vld [vmem:[#allocation2 + $0x18] sm:$0xf]
    %v59 = vld [vmem:[#allocation2 + $0x1c] sm:$0xf]
    %v60 = vld [vmem:[#allocation2 + $0x20] sm:$0xf]
    %v61 = vld [vmem:[#allocation2 + $0x24] sm:$0xf]
    %v62 = vld [vmem:[#allocation2 + $0x28] sm:$0xf]
    %v63 = vld [vmem:[#allocation2 + $0x2c] sm:$0xf]
    %v64 = vld [vmem:[#allocation2 + $0x30] sm:$0xf]
    %v65 = vld [vmem:[#allocation2 + $0x34] sm:$0xf]
    %v66 = vld [vmem:[#allocation2 + $0x38] sm:$0xf]
    %v67 = vld [vmem:[#allocation2 + $0x3c] sm:$0xf]
    %v68 = vld [vmem:[%s2] sm:$0x1]
    %v70 = vlaneseq
    %v71 = vshrl.u32 %v70, 7
    %v72 = vsub.s32 0, %v71
    %v73 = vrot.slane %v68, %v72
    %v91 = vunpack.c.l.b16 %v52
    %v92 = vunpack.c.l.b16 %v53
    %v93 = vunpack.c.l.b16 %v54
    %v94 = vunpack.c.l.b16 %v55
    %v95 = vunpack.c.l.b16 %v56
    %v96 = vunpack.c.l.b16 %v57
    %v97 = vunpack.c.l.b16 %v58
    %v98 = vunpack.c.l.b16 %v59
    %v99 = vunpack.c.l.b16 %v60
    %v100 = vunpack.c.l.b16 %v61
    %v101 = vunpack.c.l.b16 %v62
    %v102 = vunpack.c.l.b16 %v63
    %v103 = vunpack.c.l.b16 %v64
    %v104 = vunpack.c.l.b16 %v65
    %v105 = vunpack.c.l.b16 %v66
    %v106 = vunpack.c.l.b16 %v67
    %v107 = vpack.c.b16 %v92, %v91
    %v108 = vpack.c.b16 %v94, %v93
    %v109 = vpack.c.b16 %v96, %v95
    %v110 = vpack.c.b16 %v98, %v97
    %v111 = vpack.c.b16 %v100, %v99
    %v112 = vpack.c.b16 %v102, %v101
    %v113 = vpack.c.b16 %v104, %v103
    %v114 = vpack.c.b16 %v106, %v105
    %123 = vmatprep.subr.bf16.mxu0 0
    %124 = vmatpush1.bf16.msra.mxu0 %v107
    %125 = vmatprep.subr.bf16.mxu0 0
    %126 = vmatpush1.bf16.msra.mxu0 %v108
    %127 = vmatprep.subr.bf16.mxu0 0
    %128 = vmatpush1.bf16.msra.mxu0 %v109
    %129 = vmatprep.subr.bf16.mxu0 0
    %130 = vmatpush1.bf16.msra.mxu0 %v110
    %131 = vmatprep.subr.bf16.mxu0 0
    %132 = vmatpush1.bf16.msra.mxu0 %v111
    %133 = vmatprep.subr.bf16.mxu0 0
    %134 = vmatpush1.bf16.msra.mxu0 %v112
    %135 = vmatprep.subr.bf16.mxu0 0
    %136 = vmatpush1.bf16.msra.mxu0 %v113
    %137 = vmatprep.subr.bf16.mxu0 0
    %138 = vmatpush1.bf16.msra.mxu0 %v114
    %139 = vmatprep.subr.bf16.mxu0 0
    %140 = vmatpush1.bf16.msra.mxu0 0
    %141 = vmatprep.subr.bf16.mxu0 0
    %142 = vmatpush1.bf16.msra.mxu0 0
    %143 = vmatprep.subr.bf16.mxu0 0
    %144 = vmatpush1.bf16.msra.mxu0 0
    %145 = vmatprep.subr.bf16.mxu0 0
    %146 = vmatpush1.bf16.msra.mxu0 0
    %147 = vmatprep.subr.bf16.mxu0 0
    %148 = vmatpush1.bf16.msra.mxu0 0
    %149 = vmatprep.subr.bf16.mxu0 0
    %150 = vmatpush1.bf16.msra.mxu0 0
    %151 = vmatprep.subr.bf16.mxu0 0
    %152 = vmatpush1.bf16.msra.mxu0 0
    %153 = vmatprep.subr.bf16.mxu0 0
    %154 = vmatpush1.bf16.msra.mxu0 0
    %155 = vmatprep.mubr.bf16.mxu0 0
    %156 = vmatmul.mubr.bf16.gmra.mrb[0].mxu0 %v51
    %v157 = vpop.f32.mrb[0].mxu0
    %v158 = vadd.f32 %v73, %v157
    %v159 = vpop.f32.mrb[0].mxu0
    %v160 = vpop.f32.mrb[0].mxu0
    %v161 = vpop.f32.mrb[0].mxu0
    %162 = vdwg.mxu0
    %v163 = vtanh.pop %v158
    %v164 = vpack.c.bf16 %v163, %v163
    %v165 = vld [vmem:[#allocation5] sm:$0xf]
    %v166 = vld [vmem:[#allocation5 + $0x4] sm:$0xf]
    %v167 = vld [vmem:[#allocation5 + $0x8] sm:$0xf]
    %v168 = vld [vmem:[#allocation5 + $0xc] sm:$0xf]
    %v169 = vld [vmem:[#allocation5 + $0x10] sm:$0xf]
    %v170 = vld [vmem:[#allocation5 + $0x14] sm:$0xf]
    %v171 = vld [vmem:[#allocation5 + $0x18] sm:$0xf]
    %v172 = vld [vmem:[#allocation5 + $0x1c] sm:$0xf]
    %v173 = vld [vmem:[#allocation5 + $0x20] sm:$0xf]
    %v174 = vld [vmem:[#allocation5 + $0x24] sm:$0xf]
    %v175 = vld [vmem:[#allocation5 + $0x28] sm:$0xf]
    %v176 = vld [vmem:[#allocation5 + $0x2c] sm:$0xf]
    %v177 = vld [vmem:[#allocation5 + $0x30] sm:$0xf]
    %v178 = vld [vmem:[#allocation5 + $0x34] sm:$0xf]
    %v179 = vld [vmem:[#allocation5 + $0x38] sm:$0xf]
    %v180 = vld [vmem:[#allocation5 + $0x3c] sm:$0xf]
    %v181 = vld [vmem:[%s4] sm:$0x1]
    %v183 = vlaneseq
    %v184 = vshrl.u32 %v183, 7
    %v185 = vsub.s32 0, %v184
    %v186 = vrot.slane %v181, %v185
    %v204 = vunpack.c.l.b16 %v165
    %v205 = vunpack.c.l.b16 %v166
    %v206 = vunpack.c.l.b16 %v167
    %v207 = vunpack.c.l.b16 %v168
    %v208 = vunpack.c.l.b16 %v169
    %v209 = vunpack.c.l.b16 %v170
    %v210 = vunpack.c.l.b16 %v171
    %v211 = vunpack.c.l.b16 %v172
    %v212 = vunpack.c.l.b16 %v173
    %v213 = vunpack.c.l.b16 %v174
    %v214 = vunpack.c.l.b16 %v175
    %v215 = vunpack.c.l.b16 %v176
    %v216 = vunpack.c.l.b16 %v177
    %v217 = vunpack.c.l.b16 %v178
    %v218 = vunpack.c.l.b16 %v179
    %v219 = vunpack.c.l.b16 %v180
    %v220 = vpack.c.b16 %v205, %v204
    %v221 = vpack.c.b16 %v207, %v206
    %v222 = vpack.c.b16 %v209, %v208
    %v223 = vpack.c.b16 %v211, %v210
    %v224 = vpack.c.b16 %v213, %v212
    %v225 = vpack.c.b16 %v215, %v214
    %v226 = vpack.c.b16 %v217, %v216
    %v227 = vpack.c.b16 %v219, %v218
    %236 = vmatprep.subr.bf16.mxu0 0
    %237 = vmatpush1.bf16.msra.mxu0 %v220
    %238 = vmatprep.subr.bf16.mxu0 0
    %239 = vmatpush1.bf16.msra.mxu0 %v221
    %240 = vmatprep.subr.bf16.mxu0 0
    %241 = vmatpush1.bf16.msra.mxu0 %v222
    %242 = vmatprep.subr.bf16.mxu0 0
    %243 = vmatpush1.bf16.msra.mxu0 %v223
    %244 = vmatprep.subr.bf16.mxu0 0
    %245 = vmatpush1.bf16.msra.mxu0 %v224
    %246 = vmatprep.subr.bf16.mxu0 0
    %247 = vmatpush1.bf16.msra.mxu0 %v225
    %248 = vmatprep.subr.bf16.mxu0 0
    %249 = vmatpush1.bf16.msra.mxu0 %v226
    %250 = vmatprep.subr.bf16.mxu0 0
    %251 = vmatpush1.bf16.msra.mxu0 %v227
    %252 = vmatprep.subr.bf16.mxu0 0
    %253 = vmatpush1.bf16.msra.mxu0 0
    %254 = vmatprep.subr.bf16.mxu0 0
    %255 = vmatpush1.bf16.msra.mxu0 0
    %256 = vmatprep.subr.bf16.mxu0 0
    %257 = vmatpush1.bf16.msra.mxu0 0
    %258 = vmatprep.subr.bf16.mxu0 0
    %259 = vmatpush1.bf16.msra.mxu0 0
    %260 = vmatprep.subr.bf16.mxu0 0
    %261 = vmatpush1.bf16.msra.mxu0 0
    %262 = vmatprep.subr.bf16.mxu0 0
    %263 = vmatpush1.bf16.msra.mxu0 0
    %264 = vmatprep.subr.bf16.mxu0 0
    %265 = vmatpush1.bf16.msra.mxu0 0
    %266 = vmatprep.subr.bf16.mxu0 0
    %267 = vmatpush1.bf16.msra.mxu0 0
    %268 = vmatprep.mubr.bf16.mxu0 0
    %269 = vmatmul.mubr.bf16.gmra.mrb[0].mxu0 %v164
    %v270 = vpop.f32.mrb[0].mxu0
    %v271 = vadd.f32 %v186, %v270
    %v272 = vpop.f32.mrb[0].mxu0
    %v273 = vpop.f32.mrb[0].mxu0
    %v274 = vpop.f32.mrb[0].mxu0
    %275 = vdwg.mxu0
    %276 = vst [vmem:[#allocation7] sm:$0xff] %v271
    // Predicated region
    $region30: #{hubert_classification_head.1} parent=1 // pred_check
      _
    $region31: #{hubert_classification_head.1} parent=1 // pred_check_branch
      %278 = sbr.rel (0) target = $region33
    $region32: #{hubert_classification_head.1} parent=1 // pred_region
      %s280 = ssub.s32 128, 128
      %281 = vsyncadd [#allocation4], %s280
      %s283 = sshll.u32 [#allocation7], 4
      %s284 = int_to_ptr.vmem [resolvable:$true] %s283
      %286 = dma.vmem_to_hbm [thread:$0]  %s284, 128, %s5, [#allocation4]
    $region33: #{hubert_classification_head.1} parent=1 // pred_fallthru
      _
    // Predicated region
    $region34: #{hubert_classification_head.1} parent=1 // pred_check
      _
    $region35: #{hubert_classification_head.1} parent=1 // pred_check_branch
      %288 = sbr.rel (0) target = $region37
    $region36: #{hubert_classification_head.1} parent=1 // pred_region
      %289 = dma.done [#allocation4], 128
    $region37: #{hubert_classification_head.1} parent=1 // pred_fallthru
      _
    %290 = vsyncpa [#allocation3], 1
    %291 = vsyncpa [#allocation6], 1
    %292 = vsyncpa [#allocation4], 1

</llo_original>
